<compile_context>
chip_gen: v6e
topology: v6e:2x2x1
jax: 0.10.0
libtpu: 0.0.40
codegen_flags: <defaults>
</compile_context>

<pallas_src>
import functools

import jax
import jax.numpy as jnp
from jax.experimental import pallas as pl
from jax.experimental.pallas import tpu as pltpu


def _round_up(v, m):
    return (v + m - 1) // m * m


def _pick_tm(m, kp, ep, budget_bytes=24 << 20):
    """Largest sublane-aligned row tile whose double-buffered VMEM use fits."""
    m_aligned = _round_up(m, 8)
    # Weight/bias are kept with a constant index_map; Pallas still allocates
    # two buffers, so count them twice to stay conservative.
    fixed = 2 * kp * ep * 2 + 2 * ep * 4
    for tm in (512, 384, 256, 128, 64, 32, 16, 8):
        tm_eff = min(tm, m_aligned)
        use = fixed + 2 * tm_eff * (kp * 2 + ep * 4)  # bf16 in, f32 out, 2 bufs
        if use <= budget_bytes:
            return tm_eff
    return 8


def _patch_embed_kernel(x_ref, w_ref, b_ref, o_ref):
    # x_ref: (TM, Kp) bf16 patch tile
    # w_ref: (Kp, Ep) bf16 projection weight (constant index_map -> resident)
    # b_ref: (1, Ep)  f32 bias
    # o_ref: (TM, Ep) f32 output tile
    acc = jnp.dot(x_ref[...], w_ref[...], preferred_element_type=jnp.float32)
    o_ref[...] = (acc + b_ref[...]).astype(o_ref.dtype)


@functools.partial(jax.jit, static_argnames=("patch_size",))
def patch_embed(x, weight, bias, *, patch_size):
    """x: (B, C, H, W) float32 (NCHW, like PyTorch).
    weight: (E, C, P, P) (PyTorch Conv2d weight layout).
    bias: (E,).
    Returns (out, out) with out: (B, num_patches, E), matching the module.
    """
    B, C, H, W = x.shape
    E = weight.shape[0]
    P = patch_size
    assert H % P == 0 and W % P == 0
    gh, gw = H // P, W // P
    num_patches = gh * gw

    # --- glue (pure layout): NCHW image -> (M, K) patch matrix, in bf16 ---
    # TODO(synk): fold this patchify rearrangement into the kernel (needs a
    # non-(8,128)-aligned image BlockSpec or allow_input_fusion) to remove the
    # extra HBM round-trip of the patch matrix.
    compute_dtype = jnp.bfloat16
    xb = x.astype(compute_dtype)
    xb = xb.reshape(B, C, gh, P, gw, P)
    xb = jnp.transpose(xb, (0, 2, 4, 1, 3, 5))            # (B, gh, gw, C, P, P)
    patches = xb.reshape(B * num_patches, C * P * P)       # (M, K)

    # weight (E, C, P, P) -> (K, E), matching the per-patch flatten order above
    w_mat = weight.reshape(E, C * P * P).T.astype(compute_dtype)
    b_mat = bias.reshape(1, E).astype(jnp.float32)

    M, K = patches.shape

    # --- MXU / lane-friendly padding: K, E -> x128; M -> tile multiple ---
    Kp = _round_up(K, 128)
    Ep = _round_up(E, 128)
    TM = _pick_tm(M, Kp, Ep)
    Mp = _round_up(M, TM)

    patches = jnp.pad(patches, ((0, Mp - M), (0, Kp - K)))
    w_mat = jnp.pad(w_mat, ((0, Kp - K), (0, Ep - E)))
    b_mat = jnp.pad(b_mat, ((0, 0), (0, Ep - E)))

    out_dtype = x.dtype
    grid = (Mp // TM,)

    cost = pl.CostEstimate(
        flops=2 * Mp * Kp * Ep,
        transcendentals=0,
        bytes_accessed=(
            Mp * Kp * patches.dtype.itemsize
            + Kp * Ep * w_mat.dtype.itemsize
            + Ep * b_mat.dtype.itemsize
            + Mp * Ep * jnp.dtype(out_dtype).itemsize
        ),
    )

    out = pl.pallas_call(
        _patch_embed_kernel,
        out_shape=jax.ShapeDtypeStruct((Mp, Ep), out_dtype),
        grid_spec=pltpu.PrefetchScalarGridSpec(
            num_scalar_prefetch=0,
            grid=grid,
            in_specs=[
                pl.BlockSpec((TM, Kp), lambda i: (i, 0)),
                pl.BlockSpec((Kp, Ep), lambda i: (0, 0)),
                pl.BlockSpec((1, Ep), lambda i: (0, 0)),
            ],
            out_specs=pl.BlockSpec((TM, Ep), lambda i: (i, 0)),
        ),
        compiler_params=pltpu.CompilerParams(
            dimension_semantics=("parallel",),
        ),
        cost_estimate=cost,
    )(patches, w_mat, b_mat)

    out = out[:M, :E].reshape(B, num_patches, E)
    return out, out


if __name__ == "__main__":
    # Small shapes consistent with the module's forward:
    # img_size=16, patch_size=4, in_chans=4, embed_dim=32, batch=2
    B, C, IMG, P, E = 2, 4, 16, 4, 32

    key = jax.random.PRNGKey(0)
    kx, kw, kb = jax.random.split(key, 3)
    x = jax.random.normal(kx, (B, C, IMG, IMG), dtype=jnp.float32)
    # Deterministic synthetic Conv2d parameters (PyTorch layout: (E, C, P, P))
    weight = jax.random.normal(kw, (E, C, P, P), dtype=jnp.float32) * 0.02
    bias = jax.random.normal(kb, (E,), dtype=jnp.float32) * 0.02

    out, out2 = patch_embed(x, weight, bias, patch_size=P)
    jax.block_until_ready(out)

    # Reference: same math as the PyTorch strided conv (patchify + matmul).
    gh = gw = IMG // P
    xp = x.reshape(B, C, gh, P, gw, P).transpose(0, 2, 4, 1, 3, 5)
    patches_ref = xp.reshape(B, gh * gw, C * P * P)
    w_mat_ref = weight.reshape(E, C * P * P).T
    # (a) bf16-operand reference (matches the kernel's compute dtype exactly)
    ref_bf16 = (
        jnp.dot(
            patches_ref.astype(jnp.bfloat16),
            w_mat_ref.astype(jnp.bfloat16),
            preferred_element_type=jnp.float32,
        )
        + bias[None, None, :]
    )
    # (b) full-f32 reference (module semantics), looser tolerance for bf16 ops
    ref_f32 = patches_ref @ w_mat_ref + bias[None, None, :]

    assert out.shape == (B, gh * gw, E)
    assert out.dtype == x.dtype
    assert jnp.allclose(out, ref_bf16, atol=1e-3, rtol=1e-3)
    assert jnp.allclose(out, ref_f32, atol=5e-2, rtol=5e-2)
    assert jnp.array_equal(out, out2)

    print("KERNEL_OK")
</pallas_src>

<mosaic_0001>
module attributes {stable_mosaic.version = 11 : i64} {
  func.func @_patch_embed_kernel(%arg0: i32, %arg1: memref<32x128xbf16, #tpu.memory_space<vmem>>, %arg2: memref<128x128xbf16, #tpu.memory_space<vmem>>, %arg3: memref<1x128xf32, #tpu.memory_space<vmem>>, %arg4: memref<32x128xf32, #tpu.memory_space<vmem>>) attributes {dimension_semantics = [#tpu.dimension_semantics<parallel>], iteration_bounds = array<i64: 1>, scalar_prefetch = 0 : i64, scratch_operands = 0 : i64, tpu.core_type = #tpu.core_type<tc>, window_params = [{transform_indices = @transform_0, window_bounds = array<i64: 32, 128>}, {pipeline_mode = #tpu.pipeline_mode<synchronous>, transform_indices = @transform_1, window_bounds = array<i64: 128, 128>}, {pipeline_mode = #tpu.pipeline_mode<synchronous>, transform_indices = @transform_2, window_bounds = array<i64: 1, 128>}, {transform_indices = @transform_3, window_bounds = array<i64: 32, 128>}]} {
    %c0 = arith.constant 0 : index
    %c0_0 = arith.constant 0 : index
    %0 = vector.load %arg1[%c0, %c0_0] : memref<32x128xbf16, #tpu.memory_space<vmem>>, vector<32x128xbf16>
    %c0_1 = arith.constant 0 : index
    %c0_2 = arith.constant 0 : index
    %1 = vector.load %arg2[%c0_1, %c0_2] : memref<128x128xbf16, #tpu.memory_space<vmem>>, vector<128x128xbf16>
    %cst = arith.constant dense<0.000000e+00> : vector<32x128xf32>
    %2 = tpu.matmul %0, %1, %cst {dimension_numbers = #tpu.dot_dimension_numbers<[1], [0], [0], [1], [0, 0, 1, 1], [], []>} : vector<32x128xbf16>, vector<128x128xbf16>, vector<32x128xf32> -> vector<32x128xf32>
    %c0_3 = arith.constant 0 : index
    %c0_4 = arith.constant 0 : index
    %3 = vector.load %arg3[%c0_3, %c0_4] : memref<1x128xf32, #tpu.memory_space<vmem>>, vector<1x128xf32>
    %4 = vector.broadcast %3 : vector<1x128xf32> to vector<32x128xf32>
    %5 = arith.addf %2, %4 : vector<32x128xf32>
    %c0_5 = arith.constant 0 : index
    %c0_6 = arith.constant 0 : index
    %6 = vector.load %arg4[%c0_5, %c0_6] : memref<32x128xf32, #tpu.memory_space<vmem>>, vector<32x128xf32>
    tpu.vector_store %arg4[%c0_5, %c0_6], %5 {strides = array<i32>} : memref<32x128xf32, #tpu.memory_space<vmem>>, vector<32x128xf32>,
    return
  }
  func.func @transform_0(%arg0: i32) -> (i32, i32) {
    %c0_i32 = arith.constant 0 : i32
    %c0_i32_0 = arith.constant 0 : i32
    return %arg0, %c0_i32 : i32, i32
  }
  func.func @transform_1(%arg0: i32) -> (i32, i32) {
    %c0_i32 = arith.constant 0 : i32
    %c0_i32_0 = arith.constant 0 : i32
    %c0_i32_1 = arith.constant 0 : i32
    return %c0_i32, %c0_i32_0 : i32, i32
  }
  func.func @transform_2(%arg0: i32) -> (i32, i32) {
    %c0_i32 = arith.constant 0 : i32
    %c0_i32_0 = arith.constant 0 : i32
    %c0_i32_1 = arith.constant 0 : i32
    return %c0_i32, %c0_i32_0 : i32, i32
  }
  func.func @transform_3(%arg0: i32) -> (i32, i32) {
    %c0_i32 = arith.constant 0 : i32
    %c0_i32_0 = arith.constant 0 : i32
    return %arg0, %c0_i32 : i32, i32
  }
}

</mosaic_0001>

<llo_original>
// kernel: patch_embed.1
$region0: #{patch_embed.1}
  #allocation0 [shape = 'u32[]', space=smem, size = 0x4, offset = 0x4, fixed_abs, tag = 'smem constant byte address 0x4 - core index']
  #allocation1 [shape = 'u32[144,128]{1,0:T(1,128)}', space=vmem, size = 0x12000, scoped, tag = 'internal scratch']
  %s0 = inlined_call_operand.vmem [shape: bf16[32,128], index: 0, kind: input, shape index: {}]
  %s1 = inlined_call_operand.vmem [shape: bf16[128,128], index: 1, kind: input, shape index: {}]
  %s2 = inlined_call_operand.vmem [shape: f32[1,128], index: 2, kind: input, shape index: {}]
  %s3 = inlined_call_operand.vmem [shape: f32[32,128], index: 3, kind: output, shape index: {}]
  %s4 = sld [smem:[#allocation0]]
  $region22: #{patch_embed.1} parent=0
    _
  %s6 = ssub.s32 1, %s4
  %s7 = scalar_select 0, %s6, %s4
  // Predicated region
  $region2: #{patch_embed.1} parent=0 // pred_check
    _
  $region3: #{patch_embed.1} parent=0 // pred_check_branch
    %9 = sbr.rel (0) target = $region5
  $region4: #{patch_embed.1} parent=0 // pred_region
    _
  $region5: #{patch_embed.1} parent=0 // pred_fallthru
    _
  // Predicated region
  $region6: #{patch_embed.1} parent=0 // pred_check
    _
  $region7: #{patch_embed.1} parent=0 // pred_check_branch
    %11 = sbr.rel (0) target = $region9
  $region8: #{patch_embed.1} parent=0 // pred_region
    _
  $region9: #{patch_embed.1} parent=0 // pred_fallthru
    _
  // Predicated region
  $region10: #{patch_embed.1} parent=0 // pred_check
    _
  $region11: #{patch_embed.1} parent=0 // pred_check_branch
    %13 = sbr.rel (0) target = $region13
  $region12: #{patch_embed.1} parent=0 // pred_region
    _
  $region13: #{patch_embed.1} parent=0 // pred_fallthru
    _
  %v15 = vld [vmem:[%s0] sm:$0xf]
  %v16 = vld [vmem:[%s0 + $0x4] sm:$0xf]
  %v17 = vld [vmem:[%s0 + $0x8] sm:$0xf]
  %v18 = vld [vmem:[%s0 + $0xc] sm:$0xf]
  %v19 = vld [vmem:[%s1] sm:$0xf]
  %v20 = vld [vmem:[%s1 + $0x4] sm:$0xf]
  %v21 = vld [vmem:[%s1 + $0x8] sm:$0xf]
  %v22 = vld [vmem:[%s1 + $0xc] sm:$0xf]
  %v23 = vld [vmem:[%s1 + $0x10] sm:$0xf]
  %v24 = vld [vmem:[%s1 + $0x14] sm:$0xf]
  %v25 = vld [vmem:[%s1 + $0x18] sm:$0xf]
  %v26 = vld [vmem:[%s1 + $0x1c] sm:$0xf]
  %v27 = vld [vmem:[%s1 + $0x20] sm:$0xf]
  %v28 = vld [vmem:[%s1 + $0x24] sm:$0xf]
  %v29 = vld [vmem:[%s1 + $0x28] sm:$0xf]
  %v30 = vld [vmem:[%s1 + $0x2c] sm:$0xf]
  %v31 = vld [vmem:[%s1 + $0x30] sm:$0xf]
  %v32 = vld [vmem:[%s1 + $0x34] sm:$0xf]
  %v33 = vld [vmem:[%s1 + $0x38] sm:$0xf]
  %v34 = vld [vmem:[%s1 + $0x3c] sm:$0xf]
  %v35 = vld [vmem:[%s2] sm:$0x1]
  %v37 = vlaneseq
  %v38 = vshrl.u32 %v37, 7
  %v39 = vsub.s32 0, %v38
  %v40 = vrot.slane %v35, %v39
  %v46 = vunpack.c.l.b16 %v15
  %v47 = vunpack.c.l.b16 %v16
  %v48 = vunpack.c.l.b16 %v17
  %v49 = vunpack.c.l.b16 %v18
  %v50 = vpack.c.b16 %v47, %v46
  %v51 = vpack.c.b16 %v49, %v48
  %v70 = vunpack.c.l.b16 %v19
  %v71 = vunpack.c.l.b16 %v20
  %v72 = vunpack.c.l.b16 %v21
  %v73 = vunpack.c.l.b16 %v22
  %v74 = vunpack.c.l.b16 %v23
  %v75 = vunpack.c.l.b16 %v24
  %v76 = vunpack.c.l.b16 %v25
  %v77 = vunpack.c.l.b16 %v26
  %v78 = vunpack.c.l.b16 %v27
  %v79 = vunpack.c.l.b16 %v28
  %v80 = vunpack.c.l.b16 %v29
  %v81 = vunpack.c.l.b16 %v30
  %v82 = vunpack.c.l.b16 %v31
  %v83 = vunpack.c.l.b16 %v32
  %v84 = vunpack.c.l.b16 %v33
  %v85 = vunpack.c.l.b16 %v34
  %v86 = vpack.c.b16 %v71, %v70
  %v87 = vpack.c.b16 %v73, %v72
  %v88 = vpack.c.b16 %v75, %v74
  %v89 = vpack.c.b16 %v77, %v76
  %v90 = vpack.c.b16 %v79, %v78
  %v91 = vpack.c.b16 %v81, %v80
  %v92 = vpack.c.b16 %v83, %v82
  %v93 = vpack.c.b16 %v85, %v84
  %102 = vmatprep.subr.bf16.mxu0 0
  %103 = vmatpush1.bf16.msra.mxu0 %v93
  %104 = vmatprep.subr.bf16.mxu0 0
  %105 = vmatpush1.bf16.msra.mxu0 %v92
  %106 = vmatprep.subr.bf16.mxu0 0
  %107 = vmatpush1.bf16.msra.mxu0 %v91
  %108 = vmatprep.subr.bf16.mxu0 0
  %109 = vmatpush1.bf16.msra.mxu0 %v90
  %110 = vmatprep.subr.bf16.mxu0 0
  %111 = vmatpush1.bf16.msra.mxu0 %v89
  %112 = vmatprep.subr.bf16.mxu0 0
  %113 = vmatpush1.bf16.msra.mxu0 %v88
  %114 = vmatprep.subr.bf16.mxu0 0
  %115 = vmatpush1.bf16.msra.mxu0 %v87
  %116 = vmatprep.subr.bf16.mxu0 0
  %117 = vmatpush1.bf16.msra.mxu0 %v86
  %118 = vmatprep.subr.bf16.mxu0 0
  %119 = vmatpush2.bf16.msra.mxu0 0
  %120 = vmatprep.subr.bf16.mxu0 0
  %121 = vmatpush2.bf16.msra.mxu0 0
  %122 = vmatprep.subr.bf16.mxu0 0
  %123 = vmatpush2.bf16.msra.mxu0 0
  %124 = vmatprep.subr.bf16.mxu0 0
  %125 = vmatpush2.bf16.msra.mxu0 0
  %126 = vmatprep.subr.bf16.mxu0 0
  %127 = vmatpush2.bf16.msra.mxu0 0
  %128 = vmatprep.subr.bf16.mxu0 0
  %129 = vmatpush2.bf16.msra.mxu0 0
  %130 = vmatprep.subr.bf16.mxu0 0
  %131 = vmatpush2.bf16.msra.mxu0 0
  %132 = vmatprep.subr.bf16.mxu0 0
  %133 = vmatpush2.bf16.msra.mxu0 0
  %134 = vmatprep.mubr.bf16.mxu0 0
  %135 = vmatmul.mubr.bf16.gmra.mxu0 %v50
  %v136 = vpop.f32.mrf.mxu0
  %v137 = vadd.f32 %v40, %v136
  %v138 = vpop.f32.mrf.mxu0
  %v139 = vpop.f32.mrf.mxu0
  %v140 = vadd.f32 %v40, %v139
  %v141 = vpop.f32.mrf.mxu0
  %142 = vmatprep.mubr.bf16.mxu0 0
  %143 = vmatmul.mubr.bf16.gmra.mxu0 %v51
  %v144 = vpop.f32.mrf.mxu0
  %v145 = vadd.f32 %v40, %v144
  %v146 = vpop.f32.mrf.mxu0
  %v147 = vpop.f32.mrf.mxu0
  %v148 = vadd.f32 %v40, %v147
  %v149 = vpop.f32.mrf.mxu0
  %150 = vdwg.mxu0
  %151 = vst [vmem:[%s3] sm:$0xff] %v137
  %152 = vst [vmem:[%s3 + $0x8] sm:$0xff] %v140
  %153 = vst [vmem:[%s3 + $0x10] sm:$0xff] %v145
  %154 = vst [vmem:[%s3 + $0x18] sm:$0xff] %v148
  // Predicated region
  $region14: #{patch_embed.1} parent=0 // pred_check
    _
  $region15: #{patch_embed.1} parent=0 // pred_check_branch
    %156 = sbr.rel (0) target = $region17
  $region16: #{patch_embed.1} parent=0 // pred_region
    _
  $region17: #{patch_embed.1} parent=0 // pred_fallthru
    _
  // Predicated region
  $region18: #{patch_embed.1} parent=0 // pred_check
    _
  $region19: #{patch_embed.1} parent=0 // pred_check_branch
    %158 = sbr.rel (0) target = $region21
  $region20: #{patch_embed.1} parent=0 // pred_region
    _
  $region21: #{patch_embed.1} parent=0 // pred_fallthru
    _

</llo_original>
